<compile_context>
chip_gen: v7x
topology: tpu7x:2x2x1
jax: 0.10.0
libtpu: 0.0.40
codegen_flags: <defaults>
</compile_context>

<pallas_src>
import functools

import jax
import jax.numpy as jnp
from jax.experimental import pallas as pl
from jax.experimental.pallas import tpu as pltpu


def _expand_norm_shuffle_kernel(x_ref, w_ref, gamma_ref, beta_ref, o_ref):
    """x_ref: (tbh, W, C); w_ref: (C, 16C) pre-transposed; gamma/beta: (1, 16C) f32;
    o_ref: (tbh, 4, W, 4C)."""
    tbh, W, C = x_ref.shape
    c4 = 4 * C

    x2 = x_ref[...].reshape(tbh * W, C)

    # Linear expand C -> 16C on the MXU, canonical (M,K)x(K,N) layout,
    # f32 accumulation.
    y = jax.lax.dot_general(
        x2, w_ref[...],
        dimension_numbers=(((1,), (0,)), ((), ())),
        preferred_element_type=jnp.float32)                 # (tbh*W, 16C) f32

    # LayerNorm statistics over the expanded axis (f32, centered variance,
    # eps matches nn.LayerNorm's default).
    mean = jnp.mean(y, axis=-1, keepdims=True)
    yc = y - mean
    var = jnp.mean(yc * yc, axis=-1, keepdims=True)
    inv_std = jax.lax.rsqrt(var + 1e-5)

    gamma = gamma_ref[...]                                  # (1, 16C) f32
    beta = beta_ref[...]

    # Fused pixel-shuffle + affine: normalize each p1 slice straight out of
    # the centered f32 intermediate and store it — no full-width yn buffer.
    #   out[bh, p1, w, p2*C + c] = yn[bh, w, p1*4C + p2*C + c]
    for p1 in range(4):
        sl = slice(p1 * c4, (p1 + 1) * c4)
        res = (yc[:, sl] * inv_std) * gamma[:, sl] + beta[:, sl]
        o_ref[:, p1, :, :] = res.astype(o_ref.dtype).reshape(tbh, W, c4)


def _vmem_plan():
    """Per-generation (vmem_limit_bytes, usable_budget_bytes, target_tokens)."""
    mib = 1024 * 1024
    try:
        cap = int(pltpu.get_tpu_info().vmem_capacity_bytes)
    except Exception:
        cap = 64 * mib                                # conservative (v7x-like)
    if cap >= 96 * mib:                               # v5e / v6e: 128 MiB VMEM
        return 64 * mib, 48 * mib, 4096
    return 32 * mib, 24 * mib, 1024                   # v7x: 64 MiB VMEM


def _choose_row_tile(BH, W, C, dtype_bytes, target_tokens, vmem_budget):
    """Rows of the flattened B*H axis handled per grid step."""
    c16 = 16 * C
    # Per-row VMEM cost:
    #   pipelined input block  (double-buffered): 2 * b * W * C
    #   pipelined output block (double-buffered): 2 * b * W * 16C
    #   in-kernel f32 intermediates (y, yc, one p1 slice): 4 * W * (2*16C + 4C)
    per_bh = (2 * dtype_bytes * W * C
              + 2 * dtype_bytes * W * c16
              + 4 * W * (2 * c16 + 4 * C))
    # Grid-invariant residents: weight (double-buffered) + f32 gamma/beta.
    resident = 2 * dtype_bytes * C * c16 + 2 * 2 * 4 * c16
    cap = max(1, (vmem_budget - resident) // max(per_bh, 1))
    tgt = max(1, min(max(target_tokens // max(W, 1), 1), cap, BH))

    # Prefer an EVEN number of grid steps (v7x: 2 TensorCores) and >=4 steps
    # for pipeline overlap when the problem is big enough.
    if BH % 2 == 0:
        half = BH // 2
        lim = max(1, min(int(tgt), half if BH < 8 else BH // 4))
        for t in range(lim, 0, -1):
            if half % t == 0:
                return t
    lim = min(int(tgt), BH if BH < 2 else max(1, BH // 2))
    for t in range(lim, 0, -1):
        if BH % t == 0:
            return t
    return 1


def final_patch_expand_x4(x, input_resolution, w_expand, gamma, beta):
    """JAX/Pallas equivalent of FinalPatchExpand_X4.forward (dim_scale=4).

    x:           (B, H*W, C)
    w_expand:    (16C, C)  torch nn.Linear weight (out, in), no bias
    gamma, beta: (16C,)    LayerNorm affine params
    returns:     (B, 16*H*W, C)
    """
    H, W = input_resolution
    B, L, C = x.shape
    assert L == H * W, "input feature has wrong size"
    c16 = 16 * C
    c4 = 4 * C
    assert w_expand.shape == (c16, C)

    BH = B * H
    x3 = x.reshape(BH, W, C)
    # One-time tiny transpose so the kernel contracts (M,K)x(K,N) directly.
    w_t = jnp.asarray(w_expand).T                     # (C, 16C)
    gamma2d = gamma.reshape(1, c16).astype(jnp.float32)
    beta2d = beta.reshape(1, c16).astype(jnp.float32)

    vmem_limit, vmem_budget, target_tokens = _vmem_plan()
    tbh = _choose_row_tile(BH, W, C, jnp.dtype(x.dtype).itemsize,
                           target_tokens, vmem_budget)
    grid = (BH // tbh,)

    # NOTE: if C is not a multiple of 32 the 4C output lane dim is below 128
    # and stores are masked; production Swin dims (C=96/128) are lane-dense.
    # NOTE: if corrected VMEM accounting ever forces tbh very low on v7x, an
    # inner fori_loop sub-tiling of the matmul/LN inside the kernel (keeping
    # the large output block) would recover tile size; not needed here.
    out = pl.pallas_call(
        _expand_norm_shuffle_kernel,
        out_shape=jax.ShapeDtypeStruct((BH, 4, W, c4), x.dtype),
        grid_spec=pltpu.PrefetchScalarGridSpec(
            num_scalar_prefetch=0,
            grid=grid,
            in_specs=[
                pl.BlockSpec((tbh, W, C), lambda i: (i, 0, 0)),
                pl.BlockSpec((C, c16), lambda i: (0, 0)),      # weight (resident)
                pl.BlockSpec((1, c16), lambda i: (0, 0)),      # gamma (f32)
                pl.BlockSpec((1, c16), lambda i: (0, 0)),      # beta  (f32)
            ],
            out_specs=pl.BlockSpec((tbh, 4, W, c4), lambda i: (i, 0, 0, 0)),
        ),
        compiler_params=pltpu.CompilerParams(
            dimension_semantics=("parallel",),
            vmem_limit_bytes=vmem_limit),
    )(x3, w_t, gamma2d, beta2d)

    # (BH, 4, W, 4C) row-major == (B, 4H, 4W, C) row-major -> free reshape.
    return out.reshape(B, 16 * H * W, C)


def _reference(x, input_resolution, w_expand, gamma, beta):
    """Pure-JAX reference matching PyTorch semantics."""
    H, W = input_resolution
    B, L, C = x.shape
    y = jnp.einsum("blc,oc->blo", x, w_expand,
                   precision=jax.lax.Precision.HIGHEST)       # (B, L, 16C)
    mean = jnp.mean(y, axis=-1, keepdims=True)
    var = jnp.mean((y - mean) ** 2, axis=-1, keepdims=True)
    yn = (y - mean) / jnp.sqrt(var + 1e-5) * gamma + beta
    yn = yn.reshape(B, H, W, 4, 4, C)                         # (p1, p2, c) split
    yn = jnp.transpose(yn, (0, 1, 3, 2, 4, 5))                # b h p1 w p2 c
    return yn.reshape(B, 16 * H * W, C)


def _run_case(B, dim, H, W):
    key = jax.random.PRNGKey(0)
    kx, kw, kg, kb = jax.random.split(key, 4)
    x = jax.random.normal(kx, (B, H * W, dim), dtype=jnp.float32)
    # Shapes per nn.Module __init__:
    #   expand = Linear(dim, 16*dim, bias=False) -> weight (16*dim, dim)
    #   norm   = LayerNorm(16*dim)               -> gamma, beta (16*dim,)
    w_expand = 0.2 * jax.random.normal(kw, (16 * dim, dim), dtype=jnp.float32)
    gamma = 1.0 + 0.1 * jax.random.normal(kg, (16 * dim,), dtype=jnp.float32)
    beta = 0.1 * jax.random.normal(kb, (16 * dim,), dtype=jnp.float32)

    out = final_patch_expand_x4(x, (H, W), w_expand, gamma, beta)
    out = jax.block_until_ready(out)

    ref = _reference(x, (H, W), w_expand, gamma, beta)
    assert out.shape == (B, 16 * H * W, dim), out.shape
    max_err = float(jnp.max(jnp.abs(out - ref)))
    assert jnp.allclose(out, ref, atol=1e-3, rtol=1e-3), max_err


if __name__ == "__main__":
    # Tiny-C case (4C < 128: masked-store path) — matches module defaults.
    _run_case(B=2, dim=4, H=16, W=16)
    # Lane-aligned case (4C == 128: production-like store path).
    _run_case(B=2, dim=32, H=8, W=8)
    print("KERNEL_OK")
</pallas_src>

<mosaic_0001>
module attributes {stable_mosaic.version = 11 : i64} {
  func.func @_expand_norm_shuffle_kernel(%arg0: i32, %arg1: memref<8x16x4xf32, #tpu.memory_space<vmem>>, %arg2: memref<4x64xf32, #tpu.memory_space<vmem>>, %arg3: memref<1x64xf32, #tpu.memory_space<vmem>>, %arg4: memref<1x64xf32, #tpu.memory_space<vmem>>, %arg5: memref<8x4x16x16xf32, #tpu.memory_space<vmem>>) attributes {dimension_semantics = [#tpu.dimension_semantics<parallel>], iteration_bounds = array<i64: 4>, scalar_prefetch = 0 : i64, scratch_operands = 0 : i64, tpu.core_type = #tpu.core_type<tc>, window_params = [{transform_indices = @transform_0, window_bounds = array<i64: 8, 16, 4>}, {pipeline_mode = #tpu.pipeline_mode<synchronous>, transform_indices = @transform_1, window_bounds = array<i64: 4, 64>}, {pipeline_mode = #tpu.pipeline_mode<synchronous>, transform_indices = @transform_2, window_bounds = array<i64: 1, 64>}, {pipeline_mode = #tpu.pipeline_mode<synchronous>, transform_indices = @transform_3, window_bounds = array<i64: 1, 64>}, {transform_indices = @transform_4, window_bounds = array<i64: 8, 4, 16, 16>}]} {
    %c0 = arith.constant 0 : index
    %c0_0 = arith.constant 0 : index
    %c0_1 = arith.constant 0 : index
    %0 = vector.load %arg1[%c0, %c0_0, %c0_1] : memref<8x16x4xf32, #tpu.memory_space<vmem>>, vector<8x16x4xf32>
    %1 = vector.shape_cast %0 : vector<8x16x4xf32> to vector<128x4xf32>
    %c0_2 = arith.constant 0 : index
    %c0_3 = arith.constant 0 : index
    %2 = vector.load %arg2[%c0_2, %c0_3] : memref<4x64xf32, #tpu.memory_space<vmem>>, vector<4x64xf32>
    %cst = arith.constant dense<0.000000e+00> : vector<128x64xf32>
    %3 = tpu.matmul %1, %2, %cst {dimension_numbers = #tpu.dot_dimension_numbers<[1], [0], [0], [1], [0, 0, 1, 1], [], []>} : vector<128x4xf32>, vector<4x64xf32>, vector<128x64xf32> -> vector<128x64xf32>
    %cst_4 = arith.constant dense<0.000000e+00> : vector<128xf32>
    %4 = vector.multi_reduction <add>, %3, %cst_4 [1] : vector<128x64xf32> to vector<128xf32>
    %5 = vector.shape_cast %4 : vector<128xf32> to vector<128x1xf32>
    %cst_5 = arith.constant 6.400000e+01 : f32
    %6 = vector.broadcast %cst_5 : f32 to vector<128x1xf32>
    %7 = arith.divf %5, %6 : vector<128x1xf32>
    %8 = vector.broadcast %7 : vector<128x1xf32> to vector<128x64xf32>
    %9 = arith.subf %3, %8 : vector<128x64xf32>
    %10 = arith.mulf %9, %9 : vector<128x64xf32>
    %cst_6 = arith.constant dense<0.000000e+00> : vector<128xf32>
    %11 = vector.multi_reduction <add>, %10, %cst_6 [1] : vector<128x64xf32> to vector<128xf32>
    %12 = vector.shape_cast %11 : vector<128xf32> to vector<128x1xf32>
    %cst_7 = arith.constant 6.400000e+01 : f32
    %13 = vector.broadcast %cst_7 : f32 to vector<128x1xf32>
    %14 = arith.divf %12, %13 : vector<128x1xf32>
    %cst_8 = arith.constant 9.99999974E-6 : f32
    %15 = vector.broadcast %cst_8 : f32 to vector<128x1xf32>
    %16 = arith.addf %14, %15 : vector<128x1xf32>
    %17 = math.rsqrt %16 : vector<128x1xf32>
    %c0_9 = arith.constant 0 : index
    %c0_10 = arith.constant 0 : index
    %18 = vector.load %arg3[%c0_9, %c0_10] : memref<1x64xf32, #tpu.memory_space<vmem>>, vector<1x64xf32>
    %c0_11 = arith.constant 0 : index
    %c0_12 = arith.constant 0 : index
    %19 = vector.load %arg4[%c0_11, %c0_12] : memref<1x64xf32, #tpu.memory_space<vmem>>, vector<1x64xf32>
    %20 = vector.extract_strided_slice %9 {offsets = [0, 0], sizes = [128, 16], strides = [1, 1]} : vector<128x64xf32> to vector<128x16xf32>
    %21 = vector.broadcast %17 : vector<128x1xf32> to vector<128x16xf32>
    %22 = arith.mulf %20, %21 : vector<128x16xf32>
    %23 = vector.extract_strided_slice %18 {offsets = [0, 0], sizes = [1, 16], strides = [1, 1]} : vector<1x64xf32> to vector<1x16xf32>
    %24 = vector.broadcast %23 : vector<1x16xf32> to vector<128x16xf32>
    %25 = arith.mulf %22, %24 : vector<128x16xf32>
    %26 = vector.extract_strided_slice %19 {offsets = [0, 0], sizes = [1, 16], strides = [1, 1]} : vector<1x64xf32> to vector<1x16xf32>
    %27 = vector.broadcast %26 : vector<1x16xf32> to vector<128x16xf32>
    %28 = arith.addf %25, %27 : vector<128x16xf32>
    %29 = vector.shape_cast %28 : vector<128x16xf32> to vector<8x16x16xf32>
    %c0_13 = arith.constant 0 : index
    %c0_14 = arith.constant 0 : index
    %c0_15 = arith.constant 0 : index
    %c0_16 = arith.constant 0 : index
    %30 = vector.load %arg5[%c0_13, %c0_14, %c0_15, %c0_16] : memref<8x4x16x16xf32, #tpu.memory_space<vmem>>, vector<8x1x16x16xf32>
    %31 = vector.shape_cast %30 : vector<8x1x16x16xf32> to vector<8x16x16xf32>
    %32 = vector.shape_cast %29 : vector<8x16x16xf32> to vector<8x1x16x16xf32>
    tpu.vector_store %arg5[%c0_13, %c0_14, %c0_15, %c0_16], %32 {strides = array<i32>} : memref<8x4x16x16xf32, #tpu.memory_space<vmem>>, vector<8x1x16x16xf32>,
    %33 = vector.extract_strided_slice %9 {offsets = [0, 16], sizes = [128, 16], strides = [1, 1]} : vector<128x64xf32> to vector<128x16xf32>
    %34 = vector.broadcast %17 : vector<128x1xf32> to vector<128x16xf32>
    %35 = arith.mulf %33, %34 : vector<128x16xf32>
    %36 = vector.extract_strided_slice %18 {offsets = [0, 16], sizes = [1, 16], strides = [1, 1]} : vector<1x64xf32> to vector<1x16xf32>
    %37 = vector.broadcast %36 : vector<1x16xf32> to vector<128x16xf32>
    %38 = arith.mulf %35, %37 : vector<128x16xf32>
    %39 = vector.extract_strided_slice %19 {offsets = [0, 16], sizes = [1, 16], strides = [1, 1]} : vector<1x64xf32> to vector<1x16xf32>
    %40 = vector.broadcast %39 : vector<1x16xf32> to vector<128x16xf32>
    %41 = arith.addf %38, %40 : vector<128x16xf32>
    %42 = vector.shape_cast %41 : vector<128x16xf32> to vector<8x16x16xf32>
    %c0_17 = arith.constant 0 : index
    %c1 = arith.constant 1 : index
    %c0_18 = arith.constant 0 : index
    %c0_19 = arith.constant 0 : index
    %43 = vector.load %arg5[%c0_17, %c1, %c0_18, %c0_19] : memref<8x4x16x16xf32, #tpu.memory_space<vmem>>, vector<8x1x16x16xf32>
    %44 = vector.shape_cast %43 : vector<8x1x16x16xf32> to vector<8x16x16xf32>
    %45 = vector.shape_cast %42 : vector<8x16x16xf32> to vector<8x1x16x16xf32>
    tpu.vector_store %arg5[%c0_17, %c1, %c0_18, %c0_19], %45 {strides = array<i32>} : memref<8x4x16x16xf32, #tpu.memory_space<vmem>>, vector<8x1x16x16xf32>,
    %46 = vector.extract_strided_slice %9 {offsets = [0, 32], sizes = [128, 16], strides = [1, 1]} : vector<128x64xf32> to vector<128x16xf32>
    %47 = vector.broadcast %17 : vector<128x1xf32> to vector<128x16xf32>
    %48 = arith.mulf %46, %47 : vector<128x16xf32>
    %49 = vector.extract_strided_slice %18 {offsets = [0, 32], sizes = [1, 16], strides = [1, 1]} : vector<1x64xf32> to vector<1x16xf32>
    %50 = vector.broadcast %49 : vector<1x16xf32> to vector<128x16xf32>
    %51 = arith.mulf %48, %50 : vector<128x16xf32>
    %52 = vector.extract_strided_slice %19 {offsets = [0, 32], sizes = [1, 16], strides = [1, 1]} : vector<1x64xf32> to vector<1x16xf32>
    %53 = vector.broadcast %52 : vector<1x16xf32> to vector<128x16xf32>
    %54 = arith.addf %51, %53 : vector<128x16xf32>
    %55 = vector.shape_cast %54 : vector<128x16xf32> to vector<8x16x16xf32>
    %c0_20 = arith.constant 0 : index
    %c2 = arith.constant 2 : index
    %c0_21 = arith.constant 0 : index
    %c0_22 = arith.constant 0 : index
    %56 = vector.load %arg5[%c0_20, %c2, %c0_21, %c0_22] : memref<8x4x16x16xf32, #tpu.memory_space<vmem>>, vector<8x1x16x16xf32>
    %57 = vector.shape_cast %56 : vector<8x1x16x16xf32> to vector<8x16x16xf32>
    %58 = vector.shape_cast %55 : vector<8x16x16xf32> to vector<8x1x16x16xf32>
    tpu.vector_store %arg5[%c0_20, %c2, %c0_21, %c0_22], %58 {strides = array<i32>} : memref<8x4x16x16xf32, #tpu.memory_space<vmem>>, vector<8x1x16x16xf32>,
    %59 = vector.extract_strided_slice %9 {offsets = [0, 48], sizes = [128, 16], strides = [1, 1]} : vector<128x64xf32> to vector<128x16xf32>
    %60 = vector.broadcast %17 : vector<128x1xf32> to vector<128x16xf32>
    %61 = arith.mulf %59, %60 : vector<128x16xf32>
    %62 = vector.extract_strided_slice %18 {offsets = [0, 48], sizes = [1, 16], strides = [1, 1]} : vector<1x64xf32> to vector<1x16xf32>
    %63 = vector.broadcast %62 : vector<1x16xf32> to vector<128x16xf32>
    %64 = arith.mulf %61, %63 : vector<128x16xf32>
    %65 = vector.extract_strided_slice %19 {offsets = [0, 48], sizes = [1, 16], strides = [1, 1]} : vector<1x64xf32> to vector<1x16xf32>
    %66 = vector.broadcast %65 : vector<1x16xf32> to vector<128x16xf32>
    %67 = arith.addf %64, %66 : vector<128x16xf32>
    %68 = vector.shape_cast %67 : vector<128x16xf32> to vector<8x16x16xf32>
    %c0_23 = arith.constant 0 : index
    %c3 = arith.constant 3 : index
    %c0_24 = arith.constant 0 : index
    %c0_25 = arith.constant 0 : index
    %69 = vector.load %arg5[%c0_23, %c3, %c0_24, %c0_25] : memref<8x4x16x16xf32, #tpu.memory_space<vmem>>, vector<8x1x16x16xf32>
    %70 = vector.shape_cast %69 : vector<8x1x16x16xf32> to vector<8x16x16xf32>
    %71 = vector.shape_cast %68 : vector<8x16x16xf32> to vector<8x1x16x16xf32>
    tpu.vector_store %arg5[%c0_23, %c3, %c0_24, %c0_25], %71 {strides = array<i32>} : memref<8x4x16x16xf32, #tpu.memory_space<vmem>>, vector<8x1x16x16xf32>,
    return
  }
  func.func @transform_0(%arg0: i32) -> (i32, i32, i32) {
    %c0_i32 = arith.constant 0 : i32
    %c0_i32_0 = arith.constant 0 : i32
    %c0_i32_1 = arith.constant 0 : i32
    return %arg0, %c0_i32, %c0_i32_0 : i32, i32, i32
  }
  func.func @transform_1(%arg0: i32) -> (i32, i32) {
    %c0_i32 = arith.constant 0 : i32
    %c0_i32_0 = arith.constant 0 : i32
    %c0_i32_1 = arith.constant 0 : i32
    return %c0_i32, %c0_i32_0 : i32, i32
  }
  func.func @transform_2(%arg0: i32) -> (i32, i32) {
    %c0_i32 = arith.constant 0 : i32
    %c0_i32_0 = arith.constant 0 : i32
    %c0_i32_1 = arith.constant 0 : i32
    return %c0_i32, %c0_i32_0 : i32, i32
  }
  func.func @transform_3(%arg0: i32) -> (i32, i32) {
    %c0_i32 = arith.constant 0 : i32
    %c0_i32_0 = arith.constant 0 : i32
    %c0_i32_1 = arith.constant 0 : i32
    return %c0_i32, %c0_i32_0 : i32, i32
  }
  func.func @transform_4(%arg0: i32) -> (i32, i32, i32, i32) {
    %c0_i32 = arith.constant 0 : i32
    %c0_i32_0 = arith.constant 0 : i32
    %c0_i32_1 = arith.constant 0 : i32
    %c0_i32_2 = arith.constant 0 : i32
    return %arg0, %c0_i32, %c0_i32_0, %c0_i32_1 : i32, i32, i32, i32
  }
}

</mosaic_0001>

<llo_original>
// kernel: tpu_custom_call.1
$region0: #{tpu_custom_call.1}
  #allocation0 [shape = 'u32[]', space=smem, size = 0x4, offset = 0x4, fixed_abs, tag = 'smem constant byte address 0x4 - core index']
  #allocation1 [shape = 'u32[144,128]{1,0:T(1,128)}', space=vmem, size = 0x12000, scoped, tag = 'internal scratch']
  %s0 = inlined_call_operand.vmem [shape: f32[32,16,4], index: 0, kind: input, shape index: {}]
  %s1 = inlined_call_operand.vmem [shape: f32[4,64], index: 1, kind: input, shape index: {}]
  %s2 = inlined_call_operand.vmem [shape: f32[1,64], index: 2, kind: input, shape index: {}]
  %s3 = inlined_call_operand.vmem [shape: f32[1,64], index: 3, kind: input, shape index: {}]
  %s4 = inlined_call_operand.vmem [shape: f32[32,4,16,16], index: 4, kind: output, shape index: {}]
  %s5 = sld [smem:[#allocation0]]
  $region49: #{tpu_custom_call.1} parent=0
    _
  %s7 = ssub.s32 1, %s5
  %s8 = scalar_select 0, %s7, %s5
  loop: start=0, step=1, limit=6
  $region2: #{tpu_custom_call.1} parent=0 // loop_pre_header
    _
  $region3: #{tpu_custom_call.1} parent=0 // loop_header
    %s10 = sphi 0, %s14
    %p11 = scmp.ge.s32.totalorder %s10, 6
    %s20 = sphi 0, %s22
    %s23 = sphi 0, %s20
    %s24 = sphi 0, %s23
    %s40 = sphi 0, %s24
    %s44 = sphi 0, %s44
    %s46 = sphi 0, %s44
    %s47 = sphi 0, %s46
    %s61 = sphi 0, %s47
    %s65 = sphi 0, %s65
    %s67 = sphi 0, %s65
    %s68 = sphi 0, %s67
    %s82 = sphi 0, %s68
    %s86 = sphi 0, %s86
    %s88 = sphi 0, %s86
    %s89 = sphi 0, %s88
    %s103 = sphi 0, %s89
    %s109 = sphi 0, %s111
    %s112 = sphi 0, %s109
    %s113 = sphi 0, %s112
    %s129 = sphi 0, %s113
  $region4: #{tpu_custom_call.1} parent=0 // loop_header_branch
    %13 = sbr.rel (%p11) target = $region8
  $region5: #{tpu_custom_call.1} parent=0 // loop_body
    %s15 = ssub.s32 %s10, 1
    %s16 = ssub.s32 %s10, 2
    %s17 = sadd.s32 %s10, 1
    %s18 = ssub.s32 %s10, %s17
    %p19 = scmp.eq.s32.totalorder %s18, 0
    %s21 = sadd.s32 %s20, 1
    %s22 = scalar_select %p19, %s20, %s21
    %p25 = pneg %p19
    %p26 = scmp.eq.s32.totalorder %s10, 3
    %p27 = por %p25, %p26
    %p28 = scmp.ne.s32.totalorder %s20, %s23
    %p29 = scmp.eq.s32.totalorder %s10, 0
    %p30 = por %p28, %p29
    %p31 = scmp.ne.s32.totalorder %s20, %s23
    %p32 = scmp.eq.s32.totalorder %s15, 3
    %p33 = por %p31, %p32
    %p34 = scmp.ne.s32.totalorder %s23, %s24
    %p35 = scmp.eq.s32.totalorder %s15, 0
    %p36 = por %p34, %p35
    %p37 = scmp.ne.s32.totalorder %s23, %s24
    %p38 = scmp.eq.s32.totalorder %s16, 3
    %p39 = por %p37, %p38
    %p41 = scmp.ne.s32.totalorder %s24, %s40
    %p42 = scmp.eq.s32.totalorder %s16, 0
    %p43 = por %p41, %p42
    %s45 = sadd.s32 %s44, 1
    %p48 = scmp.eq.s32.totalorder %s10, 3
    %p49 = scmp.ne.s32.totalorder %s44, %s46
    %p50 = scmp.eq.s32.totalorder %s10, 0
    %p51 = por %p49, %p50
    %p52 = scmp.ne.s32.totalorder %s44, %s46
    %p53 = scmp.eq.s32.totalorder %s15, 3
    %p54 = por %p52, %p53
    %p55 = scmp.ne.s32.totalorder %s46, %s47
    %p56 = scmp.eq.s32.totalorder %s15, 0
    %p57 = por %p55, %p56
    %p58 = scmp.ne.s32.totalorder %s46, %s47
    %p59 = scmp.eq.s32.totalorder %s16, 3
    %p60 = por %p58, %p59
    %p62 = scmp.ne.s32.totalorder %s47, %s61
    %p63 = scmp.eq.s32.totalorder %s16, 0
    %p64 = por %p62, %p63
    %s66 = sadd.s32 %s65, 1
    %p69 = scmp.eq.s32.totalorder %s10, 3
    %p70 = scmp.ne.s32.totalorder %s65, %s67
    %p71 = scmp.eq.s32.totalorder %s10, 0
    %p72 = por %p70, %p71
    %p73 = scmp.ne.s32.totalorder %s65, %s67
    %p74 = scmp.eq.s32.totalorder %s15, 3
    %p75 = por %p73, %p74
    %p76 = scmp.ne.s32.totalorder %s67, %s68
    %p77 = scmp.eq.s32.totalorder %s15, 0
    %p78 = por %p76, %p77
    %p79 = scmp.ne.s32.totalorder %s67, %s68
    %p80 = scmp.eq.s32.totalorder %s16, 3
    %p81 = por %p79, %p80
    %p83 = scmp.ne.s32.totalorder %s68, %s82
    %p84 = scmp.eq.s32.totalorder %s16, 0
    %p85 = por %p83, %p84
    %s87 = sadd.s32 %s86, 1
    %p90 = scmp.eq.s32.totalorder %s10, 3
    %p91 = scmp.ne.s32.totalorder %s86, %s88
    %p92 = scmp.eq.s32.totalorder %s10, 0
    %p93 = por %p91, %p92
    %p94 = scmp.ne.s32.totalorder %s86, %s88
    %p95 = scmp.eq.s32.totalorder %s15, 3
    %p96 = por %p94, %p95
    %p97 = scmp.ne.s32.totalorder %s88, %s89
    %p98 = scmp.eq.s32.totalorder %s15, 0
    %p99 = por %p97, %p98
    %p100 = scmp.ne.s32.totalorder %s88, %s89
    %p101 = scmp.eq.s32.totalorder %s16, 3
    %p102 = por %p100, %p101
    %p104 = scmp.ne.s32.totalorder %s89, %s103
    %p105 = scmp.eq.s32.totalorder %s16, 0
    %p106 = por %p104, %p105
    %s107 = ssub.s32 %s10, %s17
    %p108 = scmp.eq.s32.totalorder %s107, 0
    %s110 = sadd.s32 %s109, 1
    %s111 = scalar_select %p108, %s109, %s110
    %p114 = pneg %p108
    %p115 = scmp.eq.s32.totalorder %s10, 3
    %p116 = por %p114, %p115
    %p117 = scmp.ne.s32.totalorder %s109, %s112
    %p118 = scmp.eq.s32.totalorder %s10, 0
    %p119 = por %p117, %p118
    %p120 = scmp.ne.s32.totalorder %s109, %s112
    %p121 = scmp.eq.s32.totalorder %s15, 3
    %p122 = por %p120, %p121
    %p123 = scmp.ne.s32.totalorder %s112, %s113
    %p124 = scmp.eq.s32.totalorder %s15, 0
    %p125 = por %p123, %p124
    %p126 = scmp.ne.s32.totalorder %s112, %s113
    %p127 = scmp.eq.s32.totalorder %s16, 3
    %p128 = por %p126, %p127
    %p130 = scmp.ne.s32.totalorder %s113, %s129
    %p131 = scmp.eq.s32.totalorder %s16, 0
    %p132 = por %p130, %p131
    %p133 = scmp.le.s32.totalorder 1, %s10
    %p134 = scmp.lt.s32.totalorder %s10, 5
    %p135 = pnand %p133, %p134
    %p136 = pneg %p135
    // Predicated region
    $region9: #{tpu_custom_call.1} parent=5 // pred_check
      _
    $region10: #{tpu_custom_call.1} parent=5 // pred_check_branch
      %138 = sbr.rel (%p135) target = $region12
    $region11: #{tpu_custom_call.1} parent=5 // pred_region
      %s139 = ssub.s32 %s10, 1
      // Predicated region
      $region13: #{tpu_custom_call.1} parent=11 // pred_check
        %p140 = pneg %p57
      $region14: #{tpu_custom_call.1} parent=11 // pred_check_branch
        %142 = sbr.rel (%p140) target = $region16
      $region15: #{tpu_custom_call.1} parent=11 // pred_region
        _
      $region16: #{tpu_custom_call.1} parent=11 // pred_fallthru
        _
      // Predicated region
      $region17: #{tpu_custom_call.1} parent=11 // pred_check
        %p143 = pneg %p78
      $region18: #{tpu_custom_call.1} parent=11 // pred_check_branch
        %145 = sbr.rel (%p143) target = $region20
      $region19: #{tpu_custom_call.1} parent=11 // pred_region
        _
      $region20: #{tpu_custom_call.1} parent=11 // pred_fallthru
        _
      // Predicated region
      $region21: #{tpu_custom_call.1} parent=11 // pred_check
        %p146 = pneg %p99
      $region22: #{tpu_custom_call.1} parent=11 // pred_check_branch
        %148 = sbr.rel (%p146) target = $region24
      $region23: #{tpu_custom_call.1} parent=11 // pred_region
        _
      $region24: #{tpu_custom_call.1} parent=11 // pred_fallthru
        _
    $region12: #{tpu_custom_call.1} parent=5 // pred_fallthru
      _
    %p149 = scmp.lt.s32.totalorder %s10, 4
    // Predicated region
    $region25: #{tpu_custom_call.1} parent=5 // pred_check
      %p150 = pneg %p149
    $region26: #{tpu_custom_call.1} parent=5 // pred_check_branch
      %152 = sbr.rel (%p150) target = $region28
    $region27: #{tpu_custom_call.1} parent=5 // pred_region
      // Predicated region
      $region29: #{tpu_custom_call.1} parent=27 // pred_check
        %p153 = pneg %p30
      $region30: #{tpu_custom_call.1} parent=27 // pred_check_branch
        %155 = sbr.rel (%p153) target = $region32
      $region31: #{tpu_custom_call.1} parent=27 // pred_region
        %s156 = smul.u32 8, %s10
        %p157 = scmp.lt.s32.totalorder %s156, 31
        %s158 = scalar_select %p157, %s156, 31
        %s159 = smul.addr %s158, 2
        %s160 = smul.addr %s159, 8
        %s161 = scalar_lea.vmem %s0, %s160
        %s162 = smul.u32 8, %s10
      $region32: #{tpu_custom_call.1} parent=27 // pred_fallthru
        _
    $region28: #{tpu_custom_call.1} parent=5 // pred_fallthru
      _
    %p163 = scmp.le.s32.totalorder 1, %s10
    %p164 = scmp.lt.s32.totalorder %s10, 5
    %p165 = pnand %p163, %p164
    %p166 = pneg %p165
    // Predicated region
    $region33: #{tpu_custom_call.1} parent=5 // pred_check
      _
    $region34: #{tpu_custom_call.1} parent=5 // pred_check_branch
      %168 = sbr.rel (%p165) target = $region36
    $region35: #{tpu_custom_call.1} parent=5 // pred_region
      %s169 = ssub.s32 %s10, 1
      %s170 = smul.u32 8, %s15
      %p171 = scmp.lt.s32.totalorder %s170, 31
      %s172 = scalar_select %p171, %s170, 31
      %s173 = smul.addr %s172, 2
      %s174 = smul.addr %s173, 8
      %s175 = scalar_lea.vmem %s0, %s174
      %p176 = pneg %p36
      %p177 = pneg %p33
      %p178 = pneg %p57
      %p179 = pneg %p54
      %p180 = pneg %p78
      %p181 = pneg %p75
      %p182 = pneg %p99
      %p183 = pneg %p96
      %p184 = pneg %p125
      %p185 = pneg %p122
      %s186 = smul.u32 8, %s15
      %p187 = scmp.lt.s32.totalorder %s186, 31
      %s188 = scalar_select %p187, %s186, 31
      %s189 = smul.addr %s188, 8
      %s190 = smul.addr %s189, 8
      %s191 = scalar_lea.vmem %s4, %s190
      %s192 = smul.u32 8, %s15
      %p193 = scmp.lt.s32.totalorder %s192, 31
      %s194 = scalar_select %p193, %s192, 31
      %s195 = smul.addr %s194, 2
      %s196 = smul.addr %s195, 8
      %s197 = scalar_lea.vmem %s0, %s196
      %s198 = smul.u32 8, %s15
      %s199 = smul.u32 8, %s15
      %p200 = scmp.lt.s32.totalorder %s199, 31
      %s201 = scalar_select %p200, %s199, 31
      %s202 = smul.addr %s201, 8
      %s203 = smul.addr %s202, 8
      %s204 = scalar_lea.vmem %s4, %s203
      %s205 = smul.u32 8, %s15
      %v206 = vld [vmem:[%s197] sm:$0xff]
      %v207 = vld [vmem:[%s197 + $0x8] sm:$0xff]
      %v208 = vld [vmem:[%s197 + $0x10] sm:$0xff]
      %v209 = vld [vmem:[%s197 + $0x18] sm:$0xff]
      %v210 = vld [vmem:[%s197 + $0x20] sm:$0xff]
      %v211 = vld [vmem:[%s197 + $0x28] sm:$0xff]
      %v212 = vld [vmem:[%s197 + $0x30] sm:$0xff]
      %v213 = vld [vmem:[%s197 + $0x38] sm:$0xff]
      %v214 = vld [vmem:[%s197 + $0x40] sm:$0xff]
      %v215 = vld [vmem:[%s197 + $0x48] sm:$0xff]
      %v216 = vld [vmem:[%s197 + $0x50] sm:$0xff]
      %v217 = vld [vmem:[%s197 + $0x58] sm:$0xff]
      %v218 = vld [vmem:[%s197 + $0x60] sm:$0xff]
      %v219 = vld [vmem:[%s197 + $0x68] sm:$0xff]
      %v220 = vld [vmem:[%s197 + $0x70] sm:$0xff]
      %v221 = vld [vmem:[%s197 + $0x78] sm:$0xff]
      %v222 = vld [vmem:[%s1] sm:$0xf]
      %vm223 = vcmask 31744
      %v225 = vsel %vm223, %v206, 0
      %v228 = vsel %vm223, %v207, 0
      %v231 = vsel %vm223, %v208, 0
      %v234 = vsel %vm223, %v209, 0
      %v237 = vsel %vm223, %v210, 0
      %v240 = vsel %vm223, %v211, 0
      %v243 = vsel %vm223, %v212, 0
      %v246 = vsel %vm223, %v213, 0
      %v249 = vsel %vm223, %v214, 0
      %v252 = vsel %vm223, %v215, 0
      %v255 = vsel %vm223, %v216, 0
      %v258 = vsel %vm223, %v217, 0
      %v261 = vsel %vm223, %v218, 0
      %v264 = vsel %vm223, %v219, 0
      %v267 = vsel %vm223, %v220, 0
      %v270 = vsel %vm223, %v221, 0
      %vm272 = vcmask 1043456
      %v274 = vsel %vm272, %v222, 0
      %276 = vmatprep.subr.mxu0 0.0
      %277 = vmatpush1.msra.mxu0 %v274
      %278 = vmatprep.subr.mxu0 0.0
      %279 = vmatpush1.msra.mxu0 0.0
      %280 = vmatprep.subr.mxu0 0.0
      %281 = vmatpush1.msra.mxu0 0.0
      %282 = vmatprep.subr.mxu0 0.0
      %283 = vmatpush1.msra.mxu0 0.0
      %284 = vmatprep.subr.mxu0 0.0
      %285 = vmatpush1.msra.mxu0 0.0
      %286 = vmatprep.subr.mxu0 0.0
      %287 = vmatpush1.msra.mxu0 0.0
      %288 = vmatprep.subr.mxu0 0.0
      %289 = vmatpush1.msra.mxu0 0.0
      %290 = vmatprep.subr.mxu0 0.0
      %291 = vmatpush1.msra.mxu0 0.0
      %292 = vmatprep.subr.mxu0 0.0
      %293 = vmatpush1.msra.mxu0 0.0
      %294 = vmatprep.subr.mxu0 0.0
      %295 = vmatpush1.msra.mxu0 0.0
      %296 = vmatprep.subr.mxu0 0.0
      %297 = vmatpush1.msra.mxu0 0.0
      %298 = vmatprep.subr.mxu0 0.0
      %299 = vmatpush1.msra.mxu0 0.0
      %300 = vmatprep.subr.mxu0 0.0
      %301 = vmatpush1.msra.mxu0 0.0
      %302 = vmatprep.subr.mxu0 0.0
      %303 = vmatpush1.msra.mxu0 0.0
      %304 = vmatprep.subr.mxu0 0.0
      %305 = vmatpush1.msra.mxu0 0.0
      %306 = vmatprep.subr.mxu0 0.0
      %307 = vmatpush1.msra.mxu0 0.0
      %308 = vmatprep.subr.mxu0 0.0
      %309 = vmatpush1.msra.mxu0 0.0
      %310 = vmatprep.subr.mxu0 0.0
      %311 = vmatpush1.msra.mxu0 0.0
      %312 = vmatprep.subr.mxu0 0.0
      %313 = vmatpush1.msra.mxu0 0.0
      %314 = vmatprep.subr.mxu0 0.0
      %315 = vmatpush1.msra.mxu0 0.0
      %316 = vmatprep.subr.mxu0 0.0
      %317 = vmatpush1.msra.mxu0 0.0
      %318 = vmatprep.subr.mxu0 0.0
      %319 = vmatpush1.msra.mxu0 0.0
      %320 = vmatprep.subr.mxu0 0.0
      %321 = vmatpush1.msra.mxu0 0.0
      %322 = vmatprep.subr.mxu0 0.0
      %323 = vmatpush1.msra.mxu0 0.0
      %324 = vmatprep.subr.mxu0 0.0
      %325 = vmatpush1.msra.mxu0 0.0
      %326 = vmatprep.subr.mxu0 0.0
      %327 = vmatpush1.msra.mxu0 0.0
      %328 = vmatprep.subr.mxu0 0.0
      %329 = vmatpush1.msra.mxu0 0.0
      %330 = vmatprep.subr.mxu0 0.0
      %331 = vmatpush1.msra.mxu0 0.0
      %332 = vmatprep.subr.mxu0 0.0
      %333 = vmatpush1.msra.mxu0 0.0
      %334 = vmatprep.subr.mxu0 0.0
      %335 = vmatpush1.msra.mxu0 0.0
      %336 = vmatprep.subr.mxu0 0.0
      %337 = vmatpush1.msra.mxu0 0.0
      %338 = vmatprep.subr.mxu0 0.0
      %339 = vmatpush1.msra.mxu0 0.0
      %340 = vmatprep.mubr.f32.mxu0 0.0
      %341 = vmatmul.mubr.f32.gmra.mrb[0].mxu0 %v225
      %v342 = vpop.f32.mrb[0].mxu0
      %v343 = vadd.f32 0.0, %v342
      %v344 = vpop.f32.mrb[0].mxu0
      %345 = vmatprep.mubr.f32.mxu0 0.0
      %346 = vmatmul.mubr.f32.gmra.mrb[0].mxu0 %v228
      %v347 = vpop.f32.mrb[0].mxu0
      %v348 = vadd.f32 0.0, %v347
      %v349 = vpop.f32.mrb[0].mxu0
      %350 = vmatprep.mubr.f32.mxu0 0.0
      %351 = vmatmul.mubr.f32.gmra.mrb[0].mxu0 %v231
      %v352 = vpop.f32.mrb[0].mxu0
      %v353 = vadd.f32 0.0, %v352
      %v354 = vpop.f32.mrb[0].mxu0
      %355 = vmatprep.mubr.f32.mxu0 0.0
      %356 = vmatmul.mubr.f32.gmra.mrb[0].mxu0 %v234
      %v357 = vpop.f32.mrb[0].mxu0
      %v358 = vadd.f32 0.0, %v357
      %v359 = vpop.f32.mrb[0].mxu0
      %360 = vmatprep.mubr.f32.mxu0 0.0
      %361 = vmatmul.mubr.f32.gmra.mrb[0].mxu0 %v237
      %v362 = vpop.f32.mrb[0].mxu0
      %v363 = vadd.f32 0.0, %v362
      %v364 = vpop.f32.mrb[0].mxu0
      %365 = vmatprep.mubr.f32.mxu0 0.0
      %366 = vmatmul.mubr.f32.gmra.mrb[0].mxu0 %v240
      %v367 = vpop.f32.mrb[0].mxu0
      %v368 = vadd.f32 0.0, %v367
      %v369 = vpop.f32.mrb[0].mxu0
      %370 = vmatprep.mubr.f32.mxu0 0.0
      %371 = vmatmul.mubr.f32.gmra.mrb[0].mxu0 %v243
      %v372 = vpop.f32.mrb[0].mxu0
      %v373 = vadd.f32 0.0, %v372
      %v374 = vpop.f32.mrb[0].mxu0
      %375 = vmatprep.mubr.f32.mxu0 0.0
      %376 = vmatmul.mubr.f32.gmra.mrb[0].mxu0 %v246
      %v377 = vpop.f32.mrb[0].mxu0
      %v378 = vadd.f32 0.0, %v377
      %v379 = vpop.f32.mrb[0].mxu0
      %380 = vmatprep.mubr.f32.mxu0 0.0
      %381 = vmatmul.mubr.f32.gmra.mrb[0].mxu0 %v249
      %v382 = vpop.f32.mrb[0].mxu0
      %v383 = vadd.f32 0.0, %v382
      %v384 = vpop.f32.mrb[0].mxu0
      %385 = vmatprep.mubr.f32.mxu0 0.0
      %386 = vmatmul.mubr.f32.gmra.mrb[0].mxu0 %v252
      %v387 = vpop.f32.mrb[0].mxu0
      %v388 = vadd.f32 0.0, %v387
      %v389 = vpop.f32.mrb[0].mxu0
      %390 = vmatprep.mubr.f32.mxu0 0.0
      %391 = vmatmul.mubr.f32.gmra.mrb[0].mxu0 %v255
      %v392 = vpop.f32.mrb[0].mxu0
      %v393 = vadd.f32 0.0, %v392
      %v394 = vpop.f32.mrb[0].mxu0
      %395 = vmatprep.mubr.f32.mxu0 0.0
      %396 = vmatmul.mubr.f32.gmra.mrb[0].mxu0 %v258
      %v397 = vpop.f32.mrb[0].mxu0
      %v398 = vadd.f32 0.0, %v397
      %v399 = vpop.f32.mrb[0].mxu0
      %400 = vmatprep.mubr.f32.mxu0 0.0
      %401 = vmatmul.mubr.f32.gmra.mrb[0].mxu0 %v261
      %v402 = vpop.f32.mrb[0].mxu0
      %v403 = vadd.f32 0.0, %v402
      %v404 = vpop.f32.mrb[0].mxu0
      %405 = vmatprep.mubr.f32.mxu0 0.0
      %406 = vmatmul.mubr.f32.gmra.mrb[0].mxu0 %v264
      %v407 = vpop.f32.mrb[0].mxu0
      %v408 = vadd.f32 0.0, %v407
      %v409 = vpop.f32.mrb[0].mxu0
      %410 = vmatprep.mubr.f32.mxu0 0.0
      %411 = vmatmul.mubr.f32.gmra.mrb[0].mxu0 %v267
      %v412 = vpop.f32.mrb[0].mxu0
      %v413 = vadd.f32 0.0, %v412
      %v414 = vpop.f32.mrb[0].mxu0
      %415 = vmatprep.mubr.f32.mxu0 0.0
      %416 = vmatmul.mubr.f32.gmra.mrb[0].mxu0 %v270
      %v417 = vpop.f32.mrb[0].mxu0
      %v418 = vadd.f32 0.0, %v417
      %v419 = vpop.f32.mrb[0].mxu0
      %420 = vdwg.mxu0
      %vm421 = vcmask 523264
      %v422 = vsel %vm421, %v343, 0.0
      %423 = vadd.xlane.f32.xlu0 %v422
      %v424 = vpop.xlane.xlu0 %423
      %v425 = vsel %vm421, %v348, 0.0
      %426 = vadd.xlane.f32.xlu0 %v425
      %v427 = vpop.xlane.xlu0 %426
      %v428 = vsel %vm421, %v353, 0.0
      %429 = vadd.xlane.f32.xlu0 %v428
      %v430 = vpop.xlane.xlu0 %429
      %v431 = vsel %vm421, %v358, 0.0
      %432 = vadd.xlane.f32.xlu0 %v431
      %v433 = vpop.xlane.xlu0 %432
      %v434 = vsel %vm421, %v363, 0.0
      %435 = vadd.xlane.f32.xlu0 %v434
      %v436 = vpop.xlane.xlu0 %435
      %v437 = vsel %vm421, %v368, 0.0
      %438 = vadd.xlane.f32.xlu0 %v437
      %v439 = vpop.xlane.xlu0 %438
      %v440 = vsel %vm421, %v373, 0.0
      %441 = vadd.xlane.f32.xlu0 %v440
      %v442 = vpop.xlane.xlu0 %441
      %v443 = vsel %vm421, %v378, 0.0
      %444 = vadd.xlane.f32.xlu0 %v443
      %v445 = vpop.xlane.xlu0 %444
      %v446 = vsel %vm421, %v383, 0.0
      %447 = vadd.xlane.f32.xlu0 %v446
      %v448 = vpop.xlane.xlu0 %447
      %v449 = vsel %vm421, %v388, 0.0
      %450 = vadd.xlane.f32.xlu0 %v449
      %v451 = vpop.xlane.xlu0 %450
      %v452 = vsel %vm421, %v393, 0.0
      %453 = vadd.xlane.f32.xlu0 %v452
      %v454 = vpop.xlane.xlu0 %453
      %v455 = vsel %vm421, %v398, 0.0
      %456 = vadd.xlane.f32.xlu0 %v455
      %v457 = vpop.xlane.xlu0 %456
      %v458 = vsel %vm421, %v403, 0.0
      %459 = vadd.xlane.f32.xlu0 %v458
      %v460 = vpop.xlane.xlu0 %459
      %v461 = vsel %vm421, %v408, 0.0
      %462 = vadd.xlane.f32.xlu0 %v461
      %v463 = vpop.xlane.xlu0 %462
      %v464 = vsel %vm421, %v413, 0.0
      %465 = vadd.xlane.f32.xlu0 %v464
      %v466 = vpop.xlane.xlu0 %465
      %v467 = vsel %vm421, %v418, 0.0
      %468 = vadd.xlane.f32.xlu0 %v467
      %v469 = vpop.xlane.xlu0 %468
      %v470 = vrcp.pop 64.0
      %v471 = vmul.f32 %v424, %v470
      %v472 = vmul.f32 %v427, %v470
      %v473 = vmul.f32 %v430, %v470
      %v474 = vmul.f32 %v433, %v470
      %v475 = vmul.f32 %v436, %v470
      %v476 = vmul.f32 %v439, %v470
      %v477 = vmul.f32 %v442, %v470
      %v478 = vmul.f32 %v445, %v470
      %v479 = vmul.f32 %v448, %v470
      %v480 = vmul.f32 %v451, %v470
      %v481 = vmul.f32 %v454, %v470
      %v482 = vmul.f32 %v457, %v470
      %v483 = vmul.f32 %v460, %v470
      %v484 = vmul.f32 %v463, %v470
      %v485 = vmul.f32 %v466, %v470
      %v486 = vmul.f32 %v469, %v470
      %v487 = vsub.f32 %v343, %v471
      %v488 = vsub.f32 %v348, %v472
      %v489 = vsub.f32 %v353, %v473
      %v490 = vsub.f32 %v358, %v474
      %v491 = vsub.f32 %v363, %v475
      %v492 = vsub.f32 %v368, %v476
      %v493 = vsub.f32 %v373, %v477
      %v494 = vsub.f32 %v378, %v478
      %v495 = vsub.f32 %v383, %v479
      %v496 = vsub.f32 %v388, %v480
      %v497 = vsub.f32 %v393, %v481
      %v498 = vsub.f32 %v398, %v482
      %v499 = vsub.f32 %v403, %v483
      %v500 = vsub.f32 %v408, %v484
      %v501 = vsub.f32 %v413, %v485
      %v502 = vsub.f32 %v418, %v486
      %v503 = vmul.f32 %v487, %v487
      %v504 = vmul.f32 %v488, %v488
      %v505 = vmul.f32 %v489, %v489
      %v506 = vmul.f32 %v490, %v490
      %v507 = vmul.f32 %v491, %v491
      %v508 = vmul.f32 %v492, %v492
      %v509 = vmul.f32 %v493, %v493
      %v510 = vmul.f32 %v494, %v494
      %v511 = vmul.f32 %v495, %v495
      %v512 = vmul.f32 %v496, %v496
      %v513 = vmul.f32 %v497, %v497
      %v514 = vmul.f32 %v498, %v498
      %v515 = vmul.f32 %v499, %v499
      %v516 = vmul.f32 %v500, %v500
      %v517 = vmul.f32 %v501, %v501
      %v518 = vmul.f32 %v502, %v502
      %v519 = vsel %vm421, %v503, 0.0
      %520 = vadd.xlane.f32.xlu0 %v519
      %v521 = vpop.xlane.xlu0 %520
      %v522 = vsel %vm421, %v504, 0.0
      %523 = vadd.xlane.f32.xlu0 %v522
      %v524 = vpop.xlane.xlu0 %523
      %v525 = vsel %vm421, %v505, 0.0
      %526 = vadd.xlane.f32.xlu0 %v525
      %v527 = vpop.xlane.xlu0 %526
      %v528 = vsel %vm421, %v506, 0.0
      %529 = vadd.xlane.f32.xlu0 %v528
      %v530 = vpop.xlane.xlu0 %529
      %v531 = vsel %vm421, %v507, 0.0
      %532 = vadd.xlane.f32.xlu0 %v531
      %v533 = vpop.xlane.xlu0 %532
      %v534 = vsel %vm421, %v508, 0.0
      %535 = vadd.xlane.f32.xlu0 %v534
      %v536 = vpop.xlane.xlu0 %535
      %v537 = vsel %vm421, %v509, 0.0
      %538 = vadd.xlane.f32.xlu0 %v537
      %v539 = vpop.xlane.xlu0 %538
      %v540 = vsel %vm421, %v510, 0.0
      %541 = vadd.xlane.f32.xlu0 %v540
      %v542 = vpop.xlane.xlu0 %541
      %v543 = vsel %vm421, %v511, 0.0
      %544 = vadd.xlane.f32.xlu0 %v543
      %v545 = vpop.xlane.xlu0 %544
      %v546 = vsel %vm421, %v512, 0.0
      %547 = vadd.xlane.f32.xlu0 %v546
      %v548 = vpop.xlane.xlu0 %547
      %v549 = vsel %vm421, %v513, 0.0
      %550 = vadd.xlane.f32.xlu0 %v549
      %v551 = vpop.xlane.xlu0 %550
      %v552 = vsel %vm421, %v514, 0.0
      %553 = vadd.xlane.f32.xlu0 %v552
      %v554 = vpop.xlane.xlu0 %553
      %v555 = vsel %vm421, %v515, 0.0
      %556 = vadd.xlane.f32.xlu0 %v555
      %v557 = vpop.xlane.xlu0 %556
      %v558 = vsel %vm421, %v516, 0.0
      %559 = vadd.xlane.f32.xlu0 %v558
      %v560 = vpop.xlane.xlu0 %559
      %v561 = vsel %vm421, %v517, 0.0
      %562 = vadd.xlane.f32.xlu0 %v561
      %v563 = vpop.xlane.xlu0 %562
      %v564 = vsel %vm421, %v518, 0.0
      %565 = vadd.xlane.f32.xlu0 %v564
      %v566 = vpop.xlane.xlu0 %565
      %v567 = vmul.f32 %v521, %v470
      %v568 = vmul.f32 %v524, %v470
      %v569 = vmul.f32 %v527, %v470
      %v570 = vmul.f32 %v530, %v470
      %v571 = vmul.f32 %v533, %v470
      %v572 = vmul.f32 %v536, %v470
      %v573 = vmul.f32 %v539, %v470
      %v574 = vmul.f32 %v542, %v470
      %v575 = vmul.f32 %v545, %v470
      %v576 = vmul.f32 %v548, %v470
      %v577 = vmul.f32 %v551, %v470
      %v578 = vmul.f32 %v554, %v470
      %v579 = vmul.f32 %v557, %v470
      %v580 = vmul.f32 %v560, %v470
      %v581 = vmul.f32 %v563, %v470
      %v582 = vmul.f32 %v566, %v470
      %v583 = vadd.f32 %v567, 1e-05
      %v584 = vadd.f32 %v568, 1e-05
      %v585 = vadd.f32 %v569, 1e-05
      %v586 = vadd.f32 %v570, 1e-05
      %v587 = vadd.f32 %v571, 1e-05
      %v588 = vadd.f32 %v572, 1e-05
      %v589 = vadd.f32 %v573, 1e-05
      %v590 = vadd.f32 %v574, 1e-05
      %v591 = vadd.f32 %v575, 1e-05
      %v592 = vadd.f32 %v576, 1e-05
      %v593 = vadd.f32 %v577, 1e-05
      %v594 = vadd.f32 %v578, 1e-05
      %v595 = vadd.f32 %v579, 1e-05
      %v596 = vadd.f32 %v580, 1e-05
      %v597 = vadd.f32 %v581, 1e-05
      %v598 = vadd.f32 %v582, 1e-05
      %v599 = vrsqrt.pop %v583
      %v600 = vrsqrt.pop %v584
      %v601 = vrsqrt.pop %v585
      %v602 = vrsqrt.pop %v586
      %v603 = vrsqrt.pop %v587
      %v604 = vrsqrt.pop %v588
      %v605 = vrsqrt.pop %v589
      %v606 = vrsqrt.pop %v590
      %v607 = vrsqrt.pop %v591
      %v608 = vrsqrt.pop %v592
      %v609 = vrsqrt.pop %v593
      %v610 = vrsqrt.pop %v594
      %v611 = vrsqrt.pop %v595
      %v612 = vrsqrt.pop %v596
      %v613 = vrsqrt.pop %v597
      %v614 = vrsqrt.pop %v598
      %v615 = vld [vmem:[%s2] sm:$0x1]
      %v616 = vld [vmem:[%s3] sm:$0x1]
      %v617 = vmul.f32 %v487, %v599
      %v618 = vmul.f32 %v488, %v600
      %v619 = vmul.f32 %v489, %v601
      %v620 = vmul.f32 %v490, %v602
      %v621 = vmul.f32 %v491, %v603
      %v622 = vmul.f32 %v492, %v604
      %v623 = vmul.f32 %v493, %v605
      %v624 = vmul.f32 %v494, %v606
      %v625 = vmul.f32 %v495, %v607
      %v626 = vmul.f32 %v496, %v608
      %v627 = vmul.f32 %v497, %v609
      %v628 = vmul.f32 %v498, %v610
      %v629 = vmul.f32 %v499, %v611
      %v630 = vmul.f32 %v500, %v612
      %v631 = vmul.f32 %v501, %v613
      %v632 = vmul.f32 %v502, %v614
      %v634 = vlaneseq
      %v635 = vshrl.u32 %v634, 7
      %v636 = vsub.s32 0, %v635
      %v637 = vrot.slane %v615, %v636
      %v639 = vmul.f32 %v617, %v637
      %v640 = vmul.f32 %v618, %v637
      %v641 = vmul.f32 %v619, %v637
      %v642 = vmul.f32 %v620, %v637
      %v643 = vmul.f32 %v621, %v637
      %v644 = vmul.f32 %v622, %v637
      %v645 = vmul.f32 %v623, %v637
      %v646 = vmul.f32 %v624, %v637
      %v647 = vmul.f32 %v625, %v637
      %v648 = vmul.f32 %v626, %v637
      %v649 = vmul.f32 %v627, %v637
      %v650 = vmul.f32 %v628, %v637
      %v651 = vmul.f32 %v629, %v637
      %v652 = vmul.f32 %v630, %v637
      %v653 = vmul.f32 %v631, %v637
      %v654 = vmul.f32 %v632, %v637
      %v656 = vlaneseq
      %v657 = vshrl.u32 %v656, 7
      %v658 = vsub.s32 0, %v657
      %v659 = vrot.slane %v616, %v658
      %v661 = vadd.f32 %v639, %v659
      %v662 = vadd.f32 %v640, %v659
      %v663 = vadd.f32 %v641, %v659
      %v664 = vadd.f32 %v642, %v659
      %v665 = vadd.f32 %v643, %v659
      %v666 = vadd.f32 %v644, %v659
      %v667 = vadd.f32 %v645, %v659
      %v668 = vadd.f32 %v646, %v659
      %v669 = vadd.f32 %v647, %v659
      %v670 = vadd.f32 %v648, %v659
      %v671 = vadd.f32 %v649, %v659
      %v672 = vadd.f32 %v650, %v659
      %v673 = vadd.f32 %v651, %v659
      %v674 = vadd.f32 %v652, %v659
      %v675 = vadd.f32 %v653, %v659
      %v676 = vadd.f32 %v654, %v659
      %vm677 = vcmask 130048
      %678 = vst.msk [vmem:[%s204] sm:$0xff] %vm677, %v661
      %679 = vst.msk [vmem:[%s204 + $0x8] sm:$0xff] %vm677, %v662
      %680 = vst.msk [vmem:[%s204 + $0x40] sm:$0xff] %vm677, %v663
      %681 = vst.msk [vmem:[%s204 + $0x48] sm:$0xff] %vm677, %v664
      %682 = vst.msk [vmem:[%s204 + $0x80] sm:$0xff] %vm677, %v665
      %683 = vst.msk [vmem:[%s204 + $0x88] sm:$0xff] %vm677, %v666
      %684 = vst.msk [vmem:[%s204 + $0xc0] sm:$0xff] %vm677, %v667
      %685 = vst.msk [vmem:[%s204 + $0xc8] sm:$0xff] %vm677, %v668
      %686 = vst.msk [vmem:[%s204 + $0x100] sm:$0xff] %vm677, %v669
      %687 = vst.msk [vmem:[%s204 + $0x108] sm:$0xff] %vm677, %v670
      %688 = vst.msk [vmem:[%s204 + $0x140] sm:$0xff] %vm677, %v671
      %689 = vst.msk [vmem:[%s204 + $0x148] sm:$0xff] %vm677, %v672
      %690 = vst.msk [vmem:[%s204 + $0x180] sm:$0xff] %vm677, %v673
      %691 = vst.msk [vmem:[%s204 + $0x188] sm:$0xff] %vm677, %v674
      %692 = vst.msk [vmem:[%s204 + $0x1c0] sm:$0xff] %vm677, %v675
      %693 = vst.msk [vmem:[%s204 + $0x1c8] sm:$0xff] %vm677, %v676
      %710 = vrot.lane.b32.xlu0 %v661, 112
      %v711 = vpop.permute.xlu0 %710
      %712 = vrot.lane.b32.xlu0 %v662, 112
      %v713 = vpop.permute.xlu0 %712
      %714 = vrot.lane.b32.xlu0 %v663, 112
      %v715 = vpop.permute.xlu0 %714
      %716 = vrot.lane.b32.xlu0 %v664, 112
      %v717 = vpop.permute.xlu0 %716
      %718 = vrot.lane.b32.xlu0 %v665, 112
      %v719 = vpop.permute.xlu0 %718
      %720 = vrot.lane.b32.xlu0 %v666, 112
      %v721 = vpop.permute.xlu0 %720
      %722 = vrot.lane.b32.xlu0 %v667, 112
      %v723 = vpop.permute.xlu0 %722
      %724 = vrot.lane.b32.xlu0 %v668, 112
      %v725 = vpop.permute.xlu0 %724
      %726 = vrot.lane.b32.xlu0 %v669, 112
      %v727 = vpop.permute.xlu0 %726
      %728 = vrot.lane.b32.xlu0 %v670, 112
      %v729 = vpop.permute.xlu0 %728
      %730 = vrot.lane.b32.xlu0 %v671, 112
      %v731 = vpop.permute.xlu0 %730
      %732 = vrot.lane.b32.xlu0 %v672, 112
      %v733 = vpop.permute.xlu0 %732
      %734 = vrot.lane.b32.xlu0 %v673, 112
      %v735 = vpop.permute.xlu0 %734
      %736 = vrot.lane.b32.xlu0 %v674, 112
      %v737 = vpop.permute.xlu0 %736
      %738 = vrot.lane.b32.xlu0 %v675, 112
      %v739 = vpop.permute.xlu0 %738
      %740 = vrot.lane.b32.xlu0 %v676, 112
      %v741 = vpop.permute.xlu0 %740
      %s758 = scalar_lea.vmem %s204, 16
      %759 = vst.msk [vmem:[%s758] sm:$0xff] %vm677, %v711
      %760 = vst.msk [vmem:[%s758 + $0x8] sm:$0xff] %vm677, %v713
      %761 = vst.msk [vmem:[%s758 + $0x40] sm:$0xff] %vm677, %v715
      %762 = vst.msk [vmem:[%s758 + $0x48] sm:$0xff] %vm677, %v717
      %763 = vst.msk [vmem:[%s758 + $0x80] sm:$0xff] %vm677, %v719
      %764 = vst.msk [vmem:[%s758 + $0x88] sm:$0xff] %vm677, %v721
      %765 = vst.msk [vmem:[%s758 + $0xc0] sm:$0xff] %vm677, %v723
      %766 = vst.msk [vmem:[%s758 + $0xc8] sm:$0xff] %vm677, %v725
      %767 = vst.msk [vmem:[%s758 + $0x100] sm:$0xff] %vm677, %v727
      %768 = vst.msk [vmem:[%s758 + $0x108] sm:$0xff] %vm677, %v729
      %769 = vst.msk [vmem:[%s758 + $0x140] sm:$0xff] %vm677, %v731
      %770 = vst.msk [vmem:[%s758 + $0x148] sm:$0xff] %vm677, %v733
      %771 = vst.msk [vmem:[%s758 + $0x180] sm:$0xff] %vm677, %v735
      %772 = vst.msk [vmem:[%s758 + $0x188] sm:$0xff] %vm677, %v737
      %773 = vst.msk [vmem:[%s758 + $0x1c0] sm:$0xff] %vm677, %v739
      %774 = vst.msk [vmem:[%s758 + $0x1c8] sm:$0xff] %vm677, %v741
      %775 = vrot.lane.b32.xlu0 %v661, 96
      %v776 = vpop.permute.xlu0 %775
      %777 = vrot.lane.b32.xlu0 %v662, 96
      %v778 = vpop.permute.xlu0 %777
      %779 = vrot.lane.b32.xlu0 %v663, 96
      %v780 = vpop.permute.xlu0 %779
      %781 = vrot.lane.b32.xlu0 %v664, 96
      %v782 = vpop.permute.xlu0 %781
      %783 = vrot.lane.b32.xlu0 %v665, 96
      %v784 = vpop.permute.xlu0 %783
      %785 = vrot.lane.b32.xlu0 %v666, 96
      %v786 = vpop.permute.xlu0 %785
      %787 = vrot.lane.b32.xlu0 %v667, 96
      %v788 = vpop.permute.xlu0 %787
      %789 = vrot.lane.b32.xlu0 %v668, 96
      %v790 = vpop.permute.xlu0 %789
      %791 = vrot.lane.b32.xlu0 %v669, 96
      %v792 = vpop.permute.xlu0 %791
      %793 = vrot.lane.b32.xlu0 %v670, 96
      %v794 = vpop.permute.xlu0 %793
      %795 = vrot.lane.b32.xlu0 %v671, 96
      %v796 = vpop.permute.xlu0 %795
      %797 = vrot.lane.b32.xlu0 %v672, 96
      %v798 = vpop.permute.xlu0 %797
      %799 = vrot.lane.b32.xlu0 %v673, 96
      %v800 = vpop.permute.xlu0 %799
      %801 = vrot.lane.b32.xlu0 %v674, 96
      %v802 = vpop.permute.xlu0 %801
      %803 = vrot.lane.b32.xlu0 %v675, 96
      %v804 = vpop.permute.xlu0 %803
      %805 = vrot.lane.b32.xlu0 %v676, 96
      %v806 = vpop.permute.xlu0 %805
      %s823 = scalar_lea.vmem %s204, 32
      %824 = vst.msk [vmem:[%s823] sm:$0xff] %vm677, %v776
      %825 = vst.msk [vmem:[%s823 + $0x8] sm:$0xff] %vm677, %v778
      %826 = vst.msk [vmem:[%s823 + $0x40] sm:$0xff] %vm677, %v780
      %827 = vst.msk [vmem:[%s823 + $0x48] sm:$0xff] %vm677, %v782
      %828 = vst.msk [vmem:[%s823 + $0x80] sm:$0xff] %vm677, %v784
      %829 = vst.msk [vmem:[%s823 + $0x88] sm:$0xff] %vm677, %v786
      %830 = vst.msk [vmem:[%s823 + $0xc0] sm:$0xff] %vm677, %v788
      %831 = vst.msk [vmem:[%s823 + $0xc8] sm:$0xff] %vm677, %v790
      %832 = vst.msk [vmem:[%s823 + $0x100] sm:$0xff] %vm677, %v792
      %833 = vst.msk [vmem:[%s823 + $0x108] sm:$0xff] %vm677, %v794
      %834 = vst.msk [vmem:[%s823 + $0x140] sm:$0xff] %vm677, %v796
      %835 = vst.msk [vmem:[%s823 + $0x148] sm:$0xff] %vm677, %v798
      %836 = vst.msk [vmem:[%s823 + $0x180] sm:$0xff] %vm677, %v800
      %837 = vst.msk [vmem:[%s823 + $0x188] sm:$0xff] %vm677, %v802
      %838 = vst.msk [vmem:[%s823 + $0x1c0] sm:$0xff] %vm677, %v804
      %839 = vst.msk [vmem:[%s823 + $0x1c8] sm:$0xff] %vm677, %v806
      %840 = vrot.lane.b32.xlu0 %v661, 80
      %v841 = vpop.permute.xlu0 %840
      %842 = vrot.lane.b32.xlu0 %v662, 80
      %v843 = vpop.permute.xlu0 %842
      %844 = vrot.lane.b32.xlu0 %v663, 80
      %v845 = vpop.permute.xlu0 %844
      %846 = vrot.lane.b32.xlu0 %v664, 80
      %v847 = vpop.permute.xlu0 %846
      %848 = vrot.lane.b32.xlu0 %v665, 80
      %v849 = vpop.permute.xlu0 %848
      %850 = vrot.lane.b32.xlu0 %v666, 80
      %v851 = vpop.permute.xlu0 %850
      %852 = vrot.lane.b32.xlu0 %v667, 80
      %v853 = vpop.permute.xlu0 %852
      %854 = vrot.lane.b32.xlu0 %v668, 80
      %v855 = vpop.permute.xlu0 %854
      %856 = vrot.lane.b32.xlu0 %v669, 80
      %v857 = vpop.permute.xlu0 %856
      %858 = vrot.lane.b32.xlu0 %v670, 80
      %v859 = vpop.permute.xlu0 %858
      %860 = vrot.lane.b32.xlu0 %v671, 80
      %v861 = vpop.permute.xlu0 %860
      %862 = vrot.lane.b32.xlu0 %v672, 80
      %v863 = vpop.permute.xlu0 %862
      %864 = vrot.lane.b32.xlu0 %v673, 80
      %v865 = vpop.permute.xlu0 %864
      %866 = vrot.lane.b32.xlu0 %v674, 80
      %v867 = vpop.permute.xlu0 %866
      %868 = vrot.lane.b32.xlu0 %v675, 80
      %v869 = vpop.permute.xlu0 %868
      %870 = vrot.lane.b32.xlu0 %v676, 80
      %v871 = vpop.permute.xlu0 %870
      %s888 = scalar_lea.vmem %s204, 48
      %889 = vst.msk [vmem:[%s888] sm:$0xff] %vm677, %v841
      %890 = vst.msk [vmem:[%s888 + $0x8] sm:$0xff] %vm677, %v843
      %891 = vst.msk [vmem:[%s888 + $0x40] sm:$0xff] %vm677, %v845
      %892 = vst.msk [vmem:[%s888 + $0x48] sm:$0xff] %vm677, %v847
      %893 = vst.msk [vmem:[%s888 + $0x80] sm:$0xff] %vm677, %v849
      %894 = vst.msk [vmem:[%s888 + $0x88] sm:$0xff] %vm677, %v851
      %895 = vst.msk [vmem:[%s888 + $0xc0] sm:$0xff] %vm677, %v853
      %896 = vst.msk [vmem:[%s888 + $0xc8] sm:$0xff] %vm677, %v855
      %897 = vst.msk [vmem:[%s888 + $0x100] sm:$0xff] %vm677, %v857
      %898 = vst.msk [vmem:[%s888 + $0x108] sm:$0xff] %vm677, %v859
      %899 = vst.msk [vmem:[%s888 + $0x140] sm:$0xff] %vm677, %v861
      %900 = vst.msk [vmem:[%s888 + $0x148] sm:$0xff] %vm677, %v863
      %901 = vst.msk [vmem:[%s888 + $0x180] sm:$0xff] %vm677, %v865
      %902 = vst.msk [vmem:[%s888 + $0x188] sm:$0xff] %vm677, %v867
      %903 = vst.msk [vmem:[%s888 + $0x1c0] sm:$0xff] %vm677, %v869
      %904 = vst.msk [vmem:[%s888 + $0x1c8] sm:$0xff] %vm677, %v871
      %s905 = smul.u32 8, %s15
      %p906 = scmp.lt.s32.totalorder %s905, 31
      %s907 = scalar_select %p906, %s905, 31
      %s908 = smul.addr %s907, 8
      %s909 = smul.addr %s908, 8
      %s910 = scalar_lea.vmem %s4, %s909
      // Predicated region
      $region37: #{tpu_custom_call.1} parent=35 // pred_check
        %p911 = pneg %p122
      $region38: #{tpu_custom_call.1} parent=35 // pred_check_branch
        %913 = sbr.rel (%p911) target = $region40
      $region39: #{tpu_custom_call.1} parent=35 // pred_region
        %s914 = smul.u32 8, %s15
      $region40: #{tpu_custom_call.1} parent=35 // pred_fallthru
        _
    $region36: #{tpu_custom_call.1} parent=5 // pred_fallthru
      _
    %p915 = scmp.le.s32.totalorder 2, %s10
    // Predicated region
    $region41: #{tpu_custom_call.1} parent=5 // pred_check
      %p916 = pneg %p915
    $region42: #{tpu_custom_call.1} parent=5 // pred_check_branch
      %918 = sbr.rel (%p916) target = $region44
    $region43: #{tpu_custom_call.1} parent=5 // pred_region
      %s919 = ssub.s32 %s10, 2
      // Predicated region
      $region45: #{tpu_custom_call.1} parent=43 // pred_check
        %p920 = pneg %p128
      $region46: #{tpu_custom_call.1} parent=43 // pred_check_branch
        %922 = sbr.rel (%p920) target = $region48
      $region47: #{tpu_custom_call.1} parent=43 // pred_region
        %s923 = smul.u32 8, %s16
        %p924 = scmp.lt.s32.totalorder %s923, 31
        %s925 = scalar_select %p924, %s923, 31
        %s926 = smul.addr %s925, 8
        %s927 = smul.addr %s926, 8
        %s928 = scalar_lea.vmem %s4, %s927
      $region48: #{tpu_custom_call.1} parent=43 // pred_fallthru
        _
    $region44: #{tpu_custom_call.1} parent=5 // pred_fallthru
      _
  $region6: #{tpu_custom_call.1} parent=0 // loop_footer
    %s14 = sadd.s32 1, %s10
  $region7: #{tpu_custom_call.1} parent=0 // loop_footer_branch
    %9 = sbr.rel target = $region3
  $region8: #{tpu_custom_call.1} parent=0 // loop_exit
    _

</llo_original>
